<compile_context>
chip_gen: v5e
topology: v5e:2x2
jax: 0.10.0
libtpu: 0.0.40
codegen_flags: <defaults>
</compile_context>

<pallas_src>
import functools

import jax
import jax.numpy as jnp
from jax.experimental import pallas as pl
from jax.experimental.pallas import tpu as pltpu

_CE_SMOOTH = 1e-6
_DICE_SMOOTH = 1.0
_LANES = 128
_ACC_ROWS = 8  # accumulator sublanes per group (full vreg); rows used:
#   0: sum(y_true * log(y_pred + 1e-6))   (cross-entropy numerator)
#   1: sum(y_true * y_pred)               (dice 'a')
#   2: sum(y_true)                        (dice 'b')
#   3: sum(y_pred)                        (dice 'c')
#   4..7: zero padding (keeps the accumulate a full unmasked 8x128 store)


def _mix_loss_sums_kernel(yt_ref, yp_ref, out_ref, *, block_rows, valid_rows, need_mask):
    """Accumulates 4 per-(batch,channel) partial sums over the row (spatial) axis."""
    r = pl.program_id(1)

    @pl.when(r == 0)
    def _init():
        out_ref[...] = jnp.zeros_like(out_ref)

    def _accumulate(yt, yp):
        # Cast to f32 in-kernel (native-dtype streaming); accumulate stays f32.
        yt = yt.astype(jnp.float32)
        yp = yp.astype(jnp.float32)
        log_p = jnp.log(yp + _CE_SMOOTH)  # EUP transcendental

        def rsum(x):  # (gb, block_rows, 128) -> (gb, 1, 128) lane-wise partial sums
            return jnp.sum(x, axis=1, keepdims=True)

        gb = yt.shape[0]
        block = jnp.concatenate(
            [rsum(yt * log_p),           # row 0: CE numerator
             rsum(yt * yp),              # row 1: dice 'a'
             rsum(yt),                   # row 2: dice 'b'
             rsum(yp),                   # row 3: dice 'c'
             jnp.zeros((gb, _ACC_ROWS - 4, _LANES), jnp.float32)],
            axis=1)                      # (gb, 8, 128)
        out_ref[...] += block            # single full-vreg unmasked accumulate

    if need_mask:
        last = pl.num_programs(1) - 1

        @pl.when(r < last)
        def _hot():                      # hot path: no mask work at all
            _accumulate(yt_ref[...], yp_ref[...])

        @pl.when(r == last)
        def _tail():                     # ragged last tile: mask BEFORE the log
            yt = yt_ref[...].astype(jnp.float32)
            yp = yp_ref[...].astype(jnp.float32)
            row = r * block_rows + jax.lax.broadcasted_iota(jnp.int32, yt.shape, 1)
            valid = row < valid_rows
            _accumulate(jnp.where(valid, yt, 0.0), jnp.where(valid, yp, 0.0))
    else:
        _accumulate(yt_ref[...], yp_ref[...])


def _largest_divisor_leq(n, cap):
    cap = max(1, min(cap, n))
    for d in range(cap, 0, -1):
        if n % d == 0:
            return d
    return 1


def mix_loss(y_true, y_pred, *, block_rows=None, target_step_bytes=4 * 1024 * 1024):
    """Pallas implementation of mix_loss.forward for NCDHW (B, C, D, H, W) inputs."""
    assert y_true.shape == y_pred.shape, (
        "mix_loss kernel supports identically-shaped y_true / y_pred "
        "(the original crossentry term requires it).")
    # TODO(synk): the max_pool3d downsampling branch of dice_coef
    # (y_true.shape[-1] // y_pred.shape[-1] > 1) is not implemented; the PyTorch
    # reference's crossentry term would broadcast-fail for those shapes anyway.
    shape = y_true.shape
    assert len(shape) == 5, "expected 5-D NCDHW (B, C, D, H, W) inputs"
    bsz, ch = shape[0], shape[1]
    groups = bsz * ch
    spatial = shape[2] * shape[3] * shape[4]
    n_total = groups * spatial  # denominator of torch.mean in crossentry

    # Keep the native dtypes: the kernel casts to f32 per-tile in VMEM.
    yt = y_true.reshape(groups, spatial)
    yp = y_pred.reshape(groups, spatial)

    it = jnp.dtype(yt.dtype).itemsize
    ip = jnp.dtype(yp.dtype).itemsize
    pack = 32 // min(it, ip)  # sublane packing multiple: 8 (f32), 16 (bf16), 32 (int8)

    lane_pad = (-spatial) % _LANES
    if lane_pad:
        # TODO(synk): mask the lane tail in-kernel (2-D blocks) instead of padding;
        # this is rare for 3-D UNet volumes and the pad is in the native dtype.
        # Zero padding is exact for all four sums (0 * log(1e-6) == 0).
        yt = jnp.pad(yt, ((0, 0), (0, lane_pad)))
        yp = jnp.pad(yp, ((0, 0), (0, lane_pad)))
    rows = (spatial + lane_pad) // _LANES

    yt3 = yt.reshape(groups, rows, _LANES)
    yp3 = yp.reshape(groups, rows, _LANES)

    # --- tile sizing: ~target_step_bytes of input per grid step, double-buffered this
    # stays well under the 16 MiB (v5e) / 32 MiB (v6e, v7x) default scoped VMEM.
    if block_rows is None:
        block_rows = max(pack, target_step_bytes // (_LANES * (it + ip)))
    block_rows = max(pack, (block_rows // pack) * pack)

    if rows <= block_rows:
        # Small volume: take all rows per step and block the GROUP axis instead so each
        # grid step still streams a large chunk. Cap gb so the parallel group axis keeps
        # >= 2 blocks (both v7x TensorCores busy); neutral on single-TC v5e/v6e.
        block_rows_eff = rows
        desired_gb = max(1, block_rows // max(rows, 1))
        gb_cap = groups if groups == 1 else max(1, groups // 2)
        gb = _largest_divisor_leq(groups, min(desired_gb, gb_cap))
    else:
        block_rows_eff = block_rows
        gb = 1

    grid_g = groups // gb
    grid_r = pl.cdiv(rows, block_rows_eff)
    need_mask = (rows % block_rows_eff) != 0

    data_block = (gb, block_rows_eff, _LANES)
    kernel = functools.partial(
        _mix_loss_sums_kernel,
        block_rows=block_rows_eff, valid_rows=rows, need_mask=need_mask)

    cost = pl.CostEstimate(
        flops=8 * n_total,
        transcendentals=n_total,
        bytes_accessed=n_total * (it + ip) + groups * _ACC_ROWS * _LANES * 4)

    sums = pl.pallas_call(
        kernel,
        out_shape=jax.ShapeDtypeStruct((groups, _ACC_ROWS, _LANES), jnp.float32),
        grid_spec=pltpu.PrefetchScalarGridSpec(
            num_scalar_prefetch=0,
            grid=(grid_g, grid_r),
            in_specs=[pl.BlockSpec(data_block, lambda g, r: (g, r, 0)),
                      pl.BlockSpec(data_block, lambda g, r: (g, r, 0))],
            out_specs=pl.BlockSpec((gb, _ACC_ROWS, _LANES), lambda g, r: (g, 0, 0)),
        ),
        compiler_params=pltpu.CompilerParams(
            dimension_semantics=("parallel", "arbitrary")),
        cost_estimate=cost,
    )(yt3, yp3)

    # Tiny scalar epilogue in plain JAX.
    s = jnp.sum(sums[:, :4, :], axis=-1)               # (groups, 4)
    ce = -jnp.sum(s[:, 0]) / jnp.float32(n_total)      # crossentry
    dice = 2.0 * s[:, 1] / (s[:, 2] + s[:, 3] + _DICE_SMOOTH)
    return ce + 1.0 - jnp.mean(dice)                   # mix_loss


def _reference_mix_loss(y_true, y_pred):
    """Pure-JAX transcription of the PyTorch forward (size==1 -> max_pool3d identity)."""
    y_true = y_true.astype(jnp.float32)
    y_pred = y_pred.astype(jnp.float32)
    ce = -jnp.mean(y_true * jnp.log(y_pred + 1e-6))
    a = jnp.sum(y_true * y_pred, axis=(2, 3, 4))
    b = jnp.sum(y_true, axis=(2, 3, 4))
    c = jnp.sum(y_pred, axis=(2, 3, 4))
    dice = jnp.mean(2.0 * a / (b + c + 1.0))
    return ce + 1.0 - dice


if __name__ == "__main__":
    key = jax.random.PRNGKey(0)
    k1, k2 = jax.random.split(key)
    shape = (2, 4, 16, 16, 16)  # NCDHW: batch=2, channels=4, 16^3 volume

    # mix_loss has no learnable parameters (empty __init__), so nothing to init.
    y_true = jax.random.bernoulli(k1, 0.3, shape).astype(jnp.float32)
    y_pred = jax.random.uniform(k2, shape, jnp.float32, minval=0.01, maxval=0.99)

    out = jax.block_until_ready(mix_loss(y_true, y_pred))
    ref = _reference_mix_loss(y_true, y_pred)
    assert jnp.allclose(out, ref, rtol=1e-4, atol=1e-4), (out, ref)

    # Native-dtype (bf16) streaming path: cast to f32 happens inside the kernel.
    yt_bf16 = y_true.astype(jnp.bfloat16)
    yp_bf16 = y_pred.astype(jnp.bfloat16)
    out_bf16 = jax.block_until_ready(mix_loss(yt_bf16, yp_bf16))
    ref_bf16 = _reference_mix_loss(yt_bf16, yp_bf16)
    assert jnp.allclose(out_bf16, ref_bf16, rtol=1e-3, atol=1e-3), (out_bf16, ref_bf16)

    # Ragged row-tail path: small explicit block_rows forces the masked last tile.
    out_tail = jax.block_until_ready(mix_loss(y_true, y_pred, block_rows=24))
    assert jnp.allclose(out_tail, ref, rtol=1e-4, atol=1e-4), (out_tail, ref)

    print("KERNEL_OK")
</pallas_src>

<mosaic_0001>
module attributes {stable_mosaic.version = 11 : i64} {
  func.func @_mix_loss_sums_kernel(%arg0: i32, %arg1: i32, %arg2: memref<4x32x128xf32, #tpu.memory_space<vmem>>, %arg3: memref<4x32x128xf32, #tpu.memory_space<vmem>>, %arg4: memref<4x8x128xf32, #tpu.memory_space<vmem>>) attributes {dimension_semantics = [#tpu.dimension_semantics<parallel>, #tpu.dimension_semantics<arbitrary>], iteration_bounds = array<i64: 2, 1>, scalar_prefetch = 0 : i64, scratch_operands = 0 : i64, tpu.core_type = #tpu.core_type<tc>, window_params = [{transform_indices = @transform_0, window_bounds = array<i64: 4, 32, 128>}, {transform_indices = @transform_1, window_bounds = array<i64: 4, 32, 128>}, {transform_indices = @transform_2, window_bounds = array<i64: 4, 8, 128>}]} {
    %c0_i32 = arith.constant 0 : i32
    %0 = arith.cmpi eq, %arg1, %c0_i32 : i32
    %1 = arith.extui %0 : i1 to i32
    %c0_i32_0 = arith.constant 0 : i32
    %2 = arith.cmpi ne, %1, %c0_i32_0 : i32
    scf.if %2 {
      %cst_17 = arith.constant 0.000000e+00 : f32
      %23 = vector.broadcast %cst_17 : f32 to vector<4x8x128xf32>
      %c0_18 = arith.constant 0 : index
      %c0_19 = arith.constant 0 : index
      %c0_20 = arith.constant 0 : index
      %24 = vector.load %arg4[%c0_18, %c0_19, %c0_20] : memref<4x8x128xf32, #tpu.memory_space<vmem>>, vector<4x8x128xf32>
      tpu.vector_store %arg4[%c0_18, %c0_19, %c0_20], %23 {strides = array<i32>} : memref<4x8x128xf32, #tpu.memory_space<vmem>>, vector<4x8x128xf32>,
    } else {
    }
    %c0 = arith.constant 0 : index
    %c0_1 = arith.constant 0 : index
    %c0_2 = arith.constant 0 : index
    %3 = vector.load %arg2[%c0, %c0_1, %c0_2] : memref<4x32x128xf32, #tpu.memory_space<vmem>>, vector<4x32x128xf32>
    %c0_3 = arith.constant 0 : index
    %c0_4 = arith.constant 0 : index
    %c0_5 = arith.constant 0 : index
    %4 = vector.load %arg3[%c0_3, %c0_4, %c0_5] : memref<4x32x128xf32, #tpu.memory_space<vmem>>, vector<4x32x128xf32>
    %cst = arith.constant 9.99999997E-7 : f32
    %5 = vector.broadcast %cst : f32 to vector<4x32x128xf32>
    %6 = arith.addf %4, %5 : vector<4x32x128xf32>
    %7 = math.log %6 : vector<4x32x128xf32>
    %8 = arith.mulf %3, %7 : vector<4x32x128xf32>
    %cst_6 = arith.constant dense<0.000000e+00> : vector<4x128xf32>
    %9 = vector.multi_reduction <add>, %8, %cst_6 [1] : vector<4x32x128xf32> to vector<4x128xf32>
    %10 = vector.shape_cast %9 : vector<4x128xf32> to vector<4x1x128xf32>
    %11 = arith.mulf %3, %4 : vector<4x32x128xf32>
    %cst_7 = arith.constant dense<0.000000e+00> : vector<4x128xf32>
    %12 = vector.multi_reduction <add>, %11, %cst_7 [1] : vector<4x32x128xf32> to vector<4x128xf32>
    %13 = vector.shape_cast %12 : vector<4x128xf32> to vector<4x1x128xf32>
    %cst_8 = arith.constant dense<0.000000e+00> : vector<4x128xf32>
    %14 = vector.multi_reduction <add>, %3, %cst_8 [1] : vector<4x32x128xf32> to vector<4x128xf32>
    %15 = vector.shape_cast %14 : vector<4x128xf32> to vector<4x1x128xf32>
    %cst_9 = arith.constant dense<0.000000e+00> : vector<4x128xf32>
    %16 = vector.multi_reduction <add>, %4, %cst_9 [1] : vector<4x32x128xf32> to vector<4x128xf32>
    %17 = vector.shape_cast %16 : vector<4x128xf32> to vector<4x1x128xf32>
    %cst_10 = arith.constant 0.000000e+00 : f32
    %18 = vector.broadcast %cst_10 : f32 to vector<4x4x128xf32>
    %19 = tpu.concatenate %10, %13, %15, %17, %18 in 1 : vector<4x1x128xf32>, vector<4x1x128xf32>, vector<4x1x128xf32>, vector<4x1x128xf32>, vector<4x4x128xf32> -> vector<4x8x128xf32>
    %c0_11 = arith.constant 0 : index
    %c0_12 = arith.constant 0 : index
    %c0_13 = arith.constant 0 : index
    %20 = vector.load %arg4[%c0_11, %c0_12, %c0_13] : memref<4x8x128xf32, #tpu.memory_space<vmem>>, vector<4x8x128xf32>
    %21 = arith.addf %20, %19 : vector<4x8x128xf32>
    %c0_14 = arith.constant 0 : index
    %c0_15 = arith.constant 0 : index
    %c0_16 = arith.constant 0 : index
    %22 = vector.load %arg4[%c0_14, %c0_15, %c0_16] : memref<4x8x128xf32, #tpu.memory_space<vmem>>, vector<4x8x128xf32>
    tpu.vector_store %arg4[%c0_14, %c0_15, %c0_16], %21 {strides = array<i32>} : memref<4x8x128xf32, #tpu.memory_space<vmem>>, vector<4x8x128xf32>,
    return
  }
  func.func @transform_0(%arg0: i32, %arg1: i32) -> (i32, i32, i32) {
    %c0_i32 = arith.constant 0 : i32
    %c0_i32_0 = arith.constant 0 : i32
    return %arg0, %arg1, %c0_i32 : i32, i32, i32
  }
  func.func @transform_1(%arg0: i32, %arg1: i32) -> (i32, i32, i32) {
    %c0_i32 = arith.constant 0 : i32
    %c0_i32_0 = arith.constant 0 : i32
    return %arg0, %arg1, %c0_i32 : i32, i32, i32
  }
  func.func @transform_2(%arg0: i32, %arg1: i32) -> (i32, i32, i32) {
    %c0_i32 = arith.constant 0 : i32
    %c0_i32_0 = arith.constant 0 : i32
    %c0_i32_1 = arith.constant 0 : i32
    return %arg0, %c0_i32, %c0_i32_0 : i32, i32, i32
  }
}

</mosaic_0001>

<llo_original>
// kernel: tpu_custom_call.1
$region0: #{tpu_custom_call.1}
  #allocation0 [shape = 'u32[]', space=smem, size = 0x4, offset = 0x4, fixed_abs, tag = 'smem constant byte address 0x4 - core index']
  #allocation1 [shape = 'u32[72,128]{1,0:T(1,128)}', space=vmem, size = 0x9000, scoped, tag = 'internal scratch']
  %s0 = inlined_call_operand.hbm [shape: f32[8,32,128], index: 0, kind: input, shape index: {}]
  %s1 = inlined_call_operand.hbm [shape: f32[8,32,128], index: 1, kind: input, shape index: {}]
  %s2 = inlined_call_operand.hbm [shape: f32[8,8,128], index: 2, kind: output, shape index: {}]
  %s3 = sld [smem:[#allocation0]]
  $region53: #{tpu_custom_call.1} parent=0
    _
  %s5 = ssub.s32 1, %s3
  %s6 = scalar_select 0, %s5, %s3
  $region1: #{tpu_custom_call.1} parent=0
    #allocation2 [shape = 'u8[131072]{0}', space=vmem, size = 0x20000, scoped, tag = 'input window, operand 0']
    #allocation3 [shape = 's32[2]{0}', space=sflag, size = 0x8, scoped, tag = 'scoped memory for tpu_custom_call.1']
    #allocation4 [shape = 's32[2]{0}', space=sflag, size = 0x8, scoped, tag = 'scoped memory for tpu_custom_call.1']
    #allocation5 [shape = 'u8[131072]{0}', space=vmem, size = 0x20000, scoped, tag = 'input window, operand 1']
    #allocation6 [shape = 's32[2]{0}', space=sflag, size = 0x8, scoped, tag = 'scoped memory for tpu_custom_call.1']
    #allocation7 [shape = 'u8[32768]{0}', space=vmem, size = 0x8000, scoped, tag = 'output window, operand 0']
    %7 = vsyncpa [#allocation3], 0
    %s8 = scalar_lea.sflag [#allocation3], 1
    %9 = vsyncpa %s8, 0
    %10 = vsyncpa [#allocation6], 0
    %s11 = scalar_lea.sflag [#allocation6], 1
    %12 = vsyncpa %s11, 0
    %13 = vsyncpa [#allocation4], 0
    %s14 = scalar_lea.sflag [#allocation4], 1
    %15 = vsyncpa %s14, 0
    loop: start=0, step=1, limit=4
    $region2: #{tpu_custom_call.1} parent=1 // loop_pre_header
      _
    $region3: #{tpu_custom_call.1} parent=1 // loop_header
      %s17 = sphi 0, %s21
      %p18 = scmp.ge.s32.totalorder %s17, 4
      %s24 = sphi 0, %s36
      %s25 = sphi 0, %s32
      %s26 = sphi 0, %s24
      %s27 = sphi 0, %s25
      %s28 = sphi 0, %s26
      %s29 = sphi 0, %s27
      %s41 = sphi 0, %s43
      %s44 = sphi 0, %s41
      %s45 = sphi 0, %s44
      %s61 = sphi 0, %s45
      %s69 = sphi 0, %s71
      %s72 = sphi 0, %s69
      %s73 = sphi 0, %s72
      %s89 = sphi 0, %s73
      %s95 = sphi 0, %s97
      %s98 = sphi 0, %s95
      %s99 = sphi 0, %s98
      %s115 = sphi 0, %s99
    $region4: #{tpu_custom_call.1} parent=1 // loop_header_branch
      %20 = sbr.rel (%p18) target = $region8
    $region5: #{tpu_custom_call.1} parent=1 // loop_body
      %s22 = ssub.s32 %s17, 1
      %s23 = ssub.s32 %s17, 2
      %s30 = sadd.s32 1, %s25
      %p31 = scmp.ge.s32.totalorder %s30, 1
      %s32 = scalar_select %p31, 0, %s30
      %s33 = sadd.s32 1, %s24
      %s34 = scalar_select %p31, %s33, %s24
      %p35 = scmp.ge.s32.totalorder %s34, 2
      %s36 = scalar_select %p35, 0, %s34
      %s37 = ssub.s32 %s24, %s36
      %s38 = ssub.s32 %s25, %s32
      %s39 = sor.u32 %s37, %s38
      %p40 = scmp.eq.s32.totalorder %s39, 0
      %s42 = sadd.s32 %s41, 1
      %s43 = scalar_select %p40, %s41, %s42
      %p46 = pneg %p40
      %p47 = scmp.eq.s32.totalorder %s17, 1
      %p48 = por %p46, %p47
      %p49 = scmp.ne.s32.totalorder %s41, %s44
      %p50 = scmp.eq.s32.totalorder %s17, 0
      %p51 = por %p49, %p50
      %p52 = scmp.ne.s32.totalorder %s41, %s44
      %p53 = scmp.eq.s32.totalorder %s22, 1
      %p54 = por %p52, %p53
      %p55 = scmp.ne.s32.totalorder %s44, %s45
      %p56 = scmp.eq.s32.totalorder %s22, 0
      %p57 = por %p55, %p56
      %p58 = scmp.ne.s32.totalorder %s44, %s45
      %p59 = scmp.eq.s32.totalorder %s23, 1
      %p60 = por %p58, %p59
      %p62 = scmp.ne.s32.totalorder %s45, %s61
      %p63 = scmp.eq.s32.totalorder %s23, 0
      %p64 = por %p62, %p63
      %s65 = ssub.s32 %s24, %s36
      %s66 = ssub.s32 %s25, %s32
      %s67 = sor.u32 %s65, %s66
      %p68 = scmp.eq.s32.totalorder %s67, 0
      %s70 = sadd.s32 %s69, 1
      %s71 = scalar_select %p68, %s69, %s70
      %p74 = pneg %p68
      %p75 = scmp.eq.s32.totalorder %s17, 1
      %p76 = por %p74, %p75
      %p77 = scmp.ne.s32.totalorder %s69, %s72
      %p78 = scmp.eq.s32.totalorder %s17, 0
      %p79 = por %p77, %p78
      %p80 = scmp.ne.s32.totalorder %s69, %s72
      %p81 = scmp.eq.s32.totalorder %s22, 1
      %p82 = por %p80, %p81
      %p83 = scmp.ne.s32.totalorder %s72, %s73
      %p84 = scmp.eq.s32.totalorder %s22, 0
      %p85 = por %p83, %p84
      %p86 = scmp.ne.s32.totalorder %s72, %s73
      %p87 = scmp.eq.s32.totalorder %s23, 1
      %p88 = por %p86, %p87
      %p90 = scmp.ne.s32.totalorder %s73, %s89
      %p91 = scmp.eq.s32.totalorder %s23, 0
      %p92 = por %p90, %p91
      %s93 = ssub.s32 %s24, %s36
      %p94 = scmp.eq.s32.totalorder %s93, 0
      %s96 = sadd.s32 %s95, 1
      %s97 = scalar_select %p94, %s95, %s96
      %p100 = pneg %p94
      %p101 = scmp.eq.s32.totalorder %s17, 1
      %p102 = por %p100, %p101
      %p103 = scmp.ne.s32.totalorder %s95, %s98
      %p104 = scmp.eq.s32.totalorder %s17, 0
      %p105 = por %p103, %p104
      %p106 = scmp.ne.s32.totalorder %s95, %s98
      %p107 = scmp.eq.s32.totalorder %s22, 1
      %p108 = por %p106, %p107
      %p109 = scmp.ne.s32.totalorder %s98, %s99
      %p110 = scmp.eq.s32.totalorder %s22, 0
      %p111 = por %p109, %p110
      %p112 = scmp.ne.s32.totalorder %s98, %s99
      %p113 = scmp.eq.s32.totalorder %s23, 1
      %p114 = por %p112, %p113
      %p116 = scmp.ne.s32.totalorder %s99, %s115
      %p117 = scmp.eq.s32.totalorder %s23, 0
      %p118 = por %p116, %p117
      %p119 = scmp.le.s32.totalorder 1, %s17
      %p120 = scmp.lt.s32.totalorder %s17, 3
      %p121 = pnand %p119, %p120
      %p122 = pneg %p121
      // Predicated region
      $region9: #{tpu_custom_call.1} parent=5 // pred_check
        _
      $region10: #{tpu_custom_call.1} parent=5 // pred_check_branch
        %124 = sbr.rel (%p121) target = $region12
      $region11: #{tpu_custom_call.1} parent=5 // pred_region
        %s125 = ssub.s32 %s17, 1
      $region12: #{tpu_custom_call.1} parent=5 // pred_fallthru
        _
      %p126 = scmp.lt.s32.totalorder %s17, 2
      // Predicated region
      $region13: #{tpu_custom_call.1} parent=5 // pred_check
        %p127 = pneg %p126
      $region14: #{tpu_custom_call.1} parent=5 // pred_check_branch
        %129 = sbr.rel (%p127) target = $region16
      $region15: #{tpu_custom_call.1} parent=5 // pred_region
        // Predicated region
        $region17: #{tpu_custom_call.1} parent=15 // pred_check
          %p130 = pneg %p51
        $region18: #{tpu_custom_call.1} parent=15 // pred_check_branch
          %132 = sbr.rel (%p130) target = $region20
        $region19: #{tpu_custom_call.1} parent=15 // pred_region
          %s133 = sand.u32 %s41, 1
          %s134 = scalar_lea.sflag [#allocation3], %s133
          %s135 = sand.u32 %s41, 1
          %s136 = smul.addr %s135, 128
          %s137 = scalar_lea.vmem [#allocation2], %s136
          %s138 = smul.u32 4, %s24
          %s139 = smul.u32 4, %s25
          %141 = vsyncadd %s134, 0
          %s142 = smul.addr %s138, 4
          %s143 = sadd.s32 %s139, %s142
          %s144 = smul.addr %s143, 8
          %s145 = scalar_lea.hbm %s0, %s144
          %s146 = sshll.u32 %s145, 4
          %s147 = int_to_ptr.hbm [resolvable:$true] %s146
          %s148 = sshll.u32 %s137, 4
          %s149 = int_to_ptr.vmem [resolvable:$true] %s148
          %154 = dma.hbm_to_vmem [thread:$0]  %s147, 2048, %s149, %s134, 128, 128, 8
        $region20: #{tpu_custom_call.1} parent=15 // pred_fallthru
          _
        // Predicated region
        $region21: #{tpu_custom_call.1} parent=15 // pred_check
          %p155 = pneg %p79
        $region22: #{tpu_custom_call.1} parent=15 // pred_check_branch
          %157 = sbr.rel (%p155) target = $region24
        $region23: #{tpu_custom_call.1} parent=15 // pred_region
          %s158 = sand.u32 %s69, 1
          %s159 = scalar_lea.sflag [#allocation6], %s158
          %s160 = sand.u32 %s69, 1
          %s161 = smul.addr %s160, 128
          %s162 = scalar_lea.vmem [#allocation5], %s161
          %s163 = smul.u32 4, %s24
          %s164 = smul.u32 4, %s25
          %166 = vsyncadd %s159, 0
          %s167 = smul.addr %s163, 4
          %s168 = sadd.s32 %s164, %s167
          %s169 = smul.addr %s168, 8
          %s170 = scalar_lea.hbm %s1, %s169
          %s171 = sshll.u32 %s170, 4
          %s172 = int_to_ptr.hbm [resolvable:$true] %s171
          %s173 = sshll.u32 %s162, 4
          %s174 = int_to_ptr.vmem [resolvable:$true] %s173
          %179 = dma.hbm_to_vmem [thread:$0]  %s172, 2048, %s174, %s159, 128, 128, 8
        $region24: #{tpu_custom_call.1} parent=15 // pred_fallthru
          _
      $region16: #{tpu_custom_call.1} parent=5 // pred_fallthru
        _
      %p180 = scmp.le.s32.totalorder 1, %s17
      %p181 = scmp.lt.s32.totalorder %s17, 3
      %p182 = pnand %p180, %p181
      %p183 = pneg %p182
      // Predicated region
      $region25: #{tpu_custom_call.1} parent=5 // pred_check
        _
      $region26: #{tpu_custom_call.1} parent=5 // pred_check_branch
        %185 = sbr.rel (%p182) target = $region28
      $region27: #{tpu_custom_call.1} parent=5 // pred_region
        %s186 = ssub.s32 %s17, 1
        %s187 = sand.u32 %s44, 1
        %s188 = scalar_lea.sflag [#allocation3], %s187
        %s189 = sand.u32 %s44, 1
        %s190 = smul.addr %s189, 128
        %s191 = scalar_lea.vmem [#allocation2], %s190
        // Predicated region
        $region29: #{tpu_custom_call.1} parent=27 // pred_check
          %p192 = pneg %p57
        $region30: #{tpu_custom_call.1} parent=27 // pred_check_branch
          %194 = sbr.rel (%p192) target = $region32
        $region31: #{tpu_custom_call.1} parent=27 // pred_region
          %196 = dma.done %s188, 2048
        $region32: #{tpu_custom_call.1} parent=27 // pred_fallthru
          _
        %s197 = sand.u32 %s72, 1
        %s198 = scalar_lea.sflag [#allocation6], %s197
        %s199 = sand.u32 %s72, 1
        %s200 = smul.addr %s199, 128
        %s201 = scalar_lea.vmem [#allocation5], %s200
        // Predicated region
        $region33: #{tpu_custom_call.1} parent=27 // pred_check
          %p202 = pneg %p85
        $region34: #{tpu_custom_call.1} parent=27 // pred_check_branch
          %204 = sbr.rel (%p202) target = $region36
        $region35: #{tpu_custom_call.1} parent=27 // pred_region
          %206 = dma.done %s198, 2048
        $region36: #{tpu_custom_call.1} parent=27 // pred_fallthru
          _
        %s207 = sand.u32 %s44, 1
        %s208 = scalar_lea.sflag [#allocation3], %s207
        %s209 = sand.u32 %s44, 1
        %s210 = smul.addr %s209, 128
        %s211 = scalar_lea.vmem [#allocation2], %s210
        %p212 = pneg %p57
        %p213 = pneg %p54
        %s214 = sand.u32 %s72, 1
        %s215 = scalar_lea.sflag [#allocation6], %s214
        %s216 = sand.u32 %s72, 1
        %s217 = smul.addr %s216, 128
        %s218 = scalar_lea.vmem [#allocation5], %s217
        %p219 = pneg %p85
        %p220 = pneg %p82
        %p221 = pneg %p111
        %p222 = pneg %p108
        %s223 = sand.u32 %s98, 1
        %s224 = scalar_lea.sflag [#allocation4], %s223
        %s225 = sand.u32 %s98, 1
        %s226 = smul.addr %s225, 32
        %s227 = scalar_lea.vmem [#allocation7], %s226
        %s228 = smul.u32 4, %s26
        %s229 = smul.u32 4, %s27
        %s230 = smul.u32 4, %s26
        %s231 = smul.u32 4, %s27
        %s232 = smul.u32 4, %s26
        %p233 = scmp.eq.s32.totalorder %s27, 0
        // Predicated region
        $region37: #{tpu_custom_call.1} parent=27 // pred_check
          %p234 = pneg %p233
        $region38: #{tpu_custom_call.1} parent=27 // pred_check_branch
          %236 = sbr.rel (%p234) target = $region40
        $region39: #{tpu_custom_call.1} parent=27 // pred_region
          %237 = vst [vmem:[%s227] sm:$0xff] 0.0
          %238 = vst [vmem:[%s227 + $0x8] sm:$0xff] 0.0
          %239 = vst [vmem:[%s227 + $0x10] sm:$0xff] 0.0
          %240 = vst [vmem:[%s227 + $0x18] sm:$0xff] 0.0
        $region40: #{tpu_custom_call.1} parent=27 // pred_fallthru
          _
        %v241 = vld [vmem:[%s191] sm:$0xff]
        %v242 = vld [vmem:[%s191 + $0x8] sm:$0xff]
        %v243 = vld [vmem:[%s191 + $0x10] sm:$0xff]
        %v244 = vld [vmem:[%s191 + $0x18] sm:$0xff]
        %v245 = vld [vmem:[%s191 + $0x20] sm:$0xff]
        %v246 = vld [vmem:[%s191 + $0x28] sm:$0xff]
        %v247 = vld [vmem:[%s191 + $0x30] sm:$0xff]
        %v248 = vld [vmem:[%s191 + $0x38] sm:$0xff]
        %v249 = vld [vmem:[%s191 + $0x40] sm:$0xff]
        %v250 = vld [vmem:[%s191 + $0x48] sm:$0xff]
        %v251 = vld [vmem:[%s191 + $0x50] sm:$0xff]
        %v252 = vld [vmem:[%s191 + $0x58] sm:$0xff]
        %v253 = vld [vmem:[%s191 + $0x60] sm:$0xff]
        %v254 = vld [vmem:[%s191 + $0x68] sm:$0xff]
        %v255 = vld [vmem:[%s191 + $0x70] sm:$0xff]
        %v256 = vld [vmem:[%s191 + $0x78] sm:$0xff]
        %v257 = vld [vmem:[%s201] sm:$0xff]
        %v258 = vld [vmem:[%s201 + $0x8] sm:$0xff]
        %v259 = vld [vmem:[%s201 + $0x10] sm:$0xff]
        %v260 = vld [vmem:[%s201 + $0x18] sm:$0xff]
        %v261 = vld [vmem:[%s201 + $0x20] sm:$0xff]
        %v262 = vld [vmem:[%s201 + $0x28] sm:$0xff]
        %v263 = vld [vmem:[%s201 + $0x30] sm:$0xff]
        %v264 = vld [vmem:[%s201 + $0x38] sm:$0xff]
        %v265 = vld [vmem:[%s201 + $0x40] sm:$0xff]
        %v266 = vld [vmem:[%s201 + $0x48] sm:$0xff]
        %v267 = vld [vmem:[%s201 + $0x50] sm:$0xff]
        %v268 = vld [vmem:[%s201 + $0x58] sm:$0xff]
        %v269 = vld [vmem:[%s201 + $0x60] sm:$0xff]
        %v270 = vld [vmem:[%s201 + $0x68] sm:$0xff]
        %v271 = vld [vmem:[%s201 + $0x70] sm:$0xff]
        %v272 = vld [vmem:[%s201 + $0x78] sm:$0xff]
        %v273 = vadd.f32 %v257, 1e-06
        %v274 = vadd.f32 %v258, 1e-06
        %v275 = vadd.f32 %v259, 1e-06
        %v276 = vadd.f32 %v260, 1e-06
        %v277 = vadd.f32 %v261, 1e-06
        %v278 = vadd.f32 %v262, 1e-06
        %v279 = vadd.f32 %v263, 1e-06
        %v280 = vadd.f32 %v264, 1e-06
        %v281 = vadd.f32 %v265, 1e-06
        %v282 = vadd.f32 %v266, 1e-06
        %v283 = vadd.f32 %v267, 1e-06
        %v284 = vadd.f32 %v268, 1e-06
        %v285 = vadd.f32 %v269, 1e-06
        %v286 = vadd.f32 %v270, 1e-06
        %v287 = vadd.f32 %v271, 1e-06
        %v288 = vadd.f32 %v272, 1e-06
        %v289 = vlog2.pop %v273
        %v290 = vmul.f32 %v289, 0.6931472
        %v291 = vlog2.pop %v274
        %v292 = vmul.f32 %v291, 0.6931472
        %v293 = vlog2.pop %v275
        %v294 = vmul.f32 %v293, 0.6931472
        %v295 = vlog2.pop %v276
        %v296 = vmul.f32 %v295, 0.6931472
        %v297 = vlog2.pop %v277
        %v298 = vmul.f32 %v297, 0.6931472
        %v299 = vlog2.pop %v278
        %v300 = vmul.f32 %v299, 0.6931472
        %v301 = vlog2.pop %v279
        %v302 = vmul.f32 %v301, 0.6931472
        %v303 = vlog2.pop %v280
        %v304 = vmul.f32 %v303, 0.6931472
        %v305 = vlog2.pop %v281
        %v306 = vmul.f32 %v305, 0.6931472
        %v307 = vlog2.pop %v282
        %v308 = vmul.f32 %v307, 0.6931472
        %v309 = vlog2.pop %v283
        %v310 = vmul.f32 %v309, 0.6931472
        %v311 = vlog2.pop %v284
        %v312 = vmul.f32 %v311, 0.6931472
        %v313 = vlog2.pop %v285
        %v314 = vmul.f32 %v313, 0.6931472
        %v315 = vlog2.pop %v286
        %v316 = vmul.f32 %v315, 0.6931472
        %v317 = vlog2.pop %v287
        %v318 = vmul.f32 %v317, 0.6931472
        %v319 = vlog2.pop %v288
        %v320 = vmul.f32 %v319, 0.6931472
        %v321 = vmul.f32 %v241, %v290
        %v322 = vmul.f32 %v242, %v292
        %v323 = vmul.f32 %v243, %v294
        %v324 = vmul.f32 %v244, %v296
        %v325 = vmul.f32 %v245, %v298
        %v326 = vmul.f32 %v246, %v300
        %v327 = vmul.f32 %v247, %v302
        %v328 = vmul.f32 %v248, %v304
        %v329 = vmul.f32 %v249, %v306
        %v330 = vmul.f32 %v250, %v308
        %v331 = vmul.f32 %v251, %v310
        %v332 = vmul.f32 %v252, %v312
        %v333 = vmul.f32 %v253, %v314
        %v334 = vmul.f32 %v254, %v316
        %v335 = vmul.f32 %v255, %v318
        %v336 = vmul.f32 %v256, %v320
        %v337 = vadd.f32 %v321, %v322
        %v338 = vadd.f32 %v337, %v323
        %v339 = vadd.f32 %v338, %v324
        %v340 = vrot.slane %v339, 4
        %v341 = vadd.f32 %v339, %v340
        %v342 = vrot.slane %v341, 2
        %v343 = vadd.f32 %v341, %v342
        %v344 = vrot.slane %v343, 1
        %v345 = vadd.f32 %v343, %v344
        %v346 = vadd.f32 %v325, %v326
        %v347 = vadd.f32 %v346, %v327
        %v348 = vadd.f32 %v347, %v328
        %v349 = vrot.slane %v348, 4
        %v350 = vadd.f32 %v348, %v349
        %v351 = vrot.slane %v350, 2
        %v352 = vadd.f32 %v350, %v351
        %v353 = vrot.slane %v352, 1
        %v354 = vadd.f32 %v352, %v353
        %v355 = vadd.f32 %v329, %v330
        %v356 = vadd.f32 %v355, %v331
        %v357 = vadd.f32 %v356, %v332
        %v358 = vrot.slane %v357, 4
        %v359 = vadd.f32 %v357, %v358
        %v360 = vrot.slane %v359, 2
        %v361 = vadd.f32 %v359, %v360
        %v362 = vrot.slane %v361, 1
        %v363 = vadd.f32 %v361, %v362
        %v364 = vadd.f32 %v333, %v334
        %v365 = vadd.f32 %v364, %v335
        %v366 = vadd.f32 %v365, %v336
        %v367 = vrot.slane %v366, 4
        %v368 = vadd.f32 %v366, %v367
        %v369 = vrot.slane %v368, 2
        %v370 = vadd.f32 %v368, %v369
        %v371 = vrot.slane %v370, 1
        %v372 = vadd.f32 %v370, %v371
        %v373 = vmul.f32 %v241, %v257
        %v374 = vmul.f32 %v242, %v258
        %v375 = vmul.f32 %v243, %v259
        %v376 = vmul.f32 %v244, %v260
        %v377 = vmul.f32 %v245, %v261
        %v378 = vmul.f32 %v246, %v262
        %v379 = vmul.f32 %v247, %v263
        %v380 = vmul.f32 %v248, %v264
        %v381 = vmul.f32 %v249, %v265
        %v382 = vmul.f32 %v250, %v266
        %v383 = vmul.f32 %v251, %v267
        %v384 = vmul.f32 %v252, %v268
        %v385 = vmul.f32 %v253, %v269
        %v386 = vmul.f32 %v254, %v270
        %v387 = vmul.f32 %v255, %v271
        %v388 = vmul.f32 %v256, %v272
        %v389 = vadd.f32 %v373, %v374
        %v390 = vadd.f32 %v389, %v375
        %v391 = vadd.f32 %v390, %v376
        %v392 = vrot.slane %v391, 4
        %v393 = vadd.f32 %v391, %v392
        %v394 = vrot.slane %v393, 2
        %v395 = vadd.f32 %v393, %v394
        %v396 = vrot.slane %v395, 1
        %v397 = vadd.f32 %v395, %v396
        %v398 = vadd.f32 %v377, %v378
        %v399 = vadd.f32 %v398, %v379
        %v400 = vadd.f32 %v399, %v380
        %v401 = vrot.slane %v400, 4
        %v402 = vadd.f32 %v400, %v401
        %v403 = vrot.slane %v402, 2
        %v404 = vadd.f32 %v402, %v403
        %v405 = vrot.slane %v404, 1
        %v406 = vadd.f32 %v404, %v405
        %v407 = vadd.f32 %v381, %v382
        %v408 = vadd.f32 %v407, %v383
        %v409 = vadd.f32 %v408, %v384
        %v410 = vrot.slane %v409, 4
        %v411 = vadd.f32 %v409, %v410
        %v412 = vrot.slane %v411, 2
        %v413 = vadd.f32 %v411, %v412
        %v414 = vrot.slane %v413, 1
        %v415 = vadd.f32 %v413, %v414
        %v416 = vadd.f32 %v385, %v386
        %v417 = vadd.f32 %v416, %v387
        %v418 = vadd.f32 %v417, %v388
        %v419 = vrot.slane %v418, 4
        %v420 = vadd.f32 %v418, %v419
        %v421 = vrot.slane %v420, 2
        %v422 = vadd.f32 %v420, %v421
        %v423 = vrot.slane %v422, 1
        %v424 = vadd.f32 %v422, %v423
        %v425 = vadd.f32 %v241, %v242
        %v426 = vadd.f32 %v425, %v243
        %v427 = vadd.f32 %v426, %v244
        %v428 = vrot.slane %v427, 4
        %v429 = vadd.f32 %v427, %v428
        %v430 = vrot.slane %v429, 2
        %v431 = vadd.f32 %v429, %v430
        %v432 = vrot.slane %v431, 1
        %v433 = vadd.f32 %v431, %v432
        %v434 = vadd.f32 %v245, %v246
        %v435 = vadd.f32 %v434, %v247
        %v436 = vadd.f32 %v435, %v248
        %v437 = vrot.slane %v436, 4
        %v438 = vadd.f32 %v436, %v437
        %v439 = vrot.slane %v438, 2
        %v440 = vadd.f32 %v438, %v439
        %v441 = vrot.slane %v440, 1
        %v442 = vadd.f32 %v440, %v441
        %v443 = vadd.f32 %v249, %v250
        %v444 = vadd.f32 %v443, %v251
        %v445 = vadd.f32 %v444, %v252
        %v446 = vrot.slane %v445, 4
        %v447 = vadd.f32 %v445, %v446
        %v448 = vrot.slane %v447, 2
        %v449 = vadd.f32 %v447, %v448
        %v450 = vrot.slane %v449, 1
        %v451 = vadd.f32 %v449, %v450
        %v452 = vadd.f32 %v253, %v254
        %v453 = vadd.f32 %v452, %v255
        %v454 = vadd.f32 %v453, %v256
        %v455 = vrot.slane %v454, 4
        %v456 = vadd.f32 %v454, %v455
        %v457 = vrot.slane %v456, 2
        %v458 = vadd.f32 %v456, %v457
        %v459 = vrot.slane %v458, 1
        %v460 = vadd.f32 %v458, %v459
        %v461 = vadd.f32 %v257, %v258
        %v462 = vadd.f32 %v461, %v259
        %v463 = vadd.f32 %v462, %v260
        %v464 = vrot.slane %v463, 4
        %v465 = vadd.f32 %v463, %v464
        %v466 = vrot.slane %v465, 2
        %v467 = vadd.f32 %v465, %v466
        %v468 = vrot.slane %v467, 1
        %v469 = vadd.f32 %v467, %v468
        %v470 = vadd.f32 %v261, %v262
        %v471 = vadd.f32 %v470, %v263
        %v472 = vadd.f32 %v471, %v264
        %v473 = vrot.slane %v472, 4
        %v474 = vadd.f32 %v472, %v473
        %v475 = vrot.slane %v474, 2
        %v476 = vadd.f32 %v474, %v475
        %v477 = vrot.slane %v476, 1
        %v478 = vadd.f32 %v476, %v477
        %v479 = vadd.f32 %v265, %v266
        %v480 = vadd.f32 %v479, %v267
        %v481 = vadd.f32 %v480, %v268
        %v482 = vrot.slane %v481, 4
        %v483 = vadd.f32 %v481, %v482
        %v484 = vrot.slane %v483, 2
        %v485 = vadd.f32 %v483, %v484
        %v486 = vrot.slane %v485, 1
        %v487 = vadd.f32 %v485, %v486
        %v488 = vadd.f32 %v269, %v270
        %v489 = vadd.f32 %v488, %v271
        %v490 = vadd.f32 %v489, %v272
        %v491 = vrot.slane %v490, 4
        %v492 = vadd.f32 %v490, %v491
        %v493 = vrot.slane %v492, 2
        %v494 = vadd.f32 %v492, %v493
        %v495 = vrot.slane %v494, 1
        %v496 = vadd.f32 %v494, %v495
        %vm497 = vcmask 1040384
        %v498 = vsel %vm497, %v345, %v397
        %v499 = vsel %vm497, %v354, %v406
        %v500 = vsel %vm497, %v363, %v415
        %v501 = vsel %vm497, %v372, %v424
        %vm502 = vcmask 1041408
        %v503 = vsel %vm502, %v498, %v433
        %v504 = vsel %vm502, %v499, %v442
        %v505 = vsel %vm502, %v500, %v451
        %v506 = vsel %vm502, %v501, %v460
        %vm507 = vcmask 1042432
        %v508 = vsel %vm507, %v503, %v469
        %v509 = vsel %vm507, %v504, %v478
        %v510 = vsel %vm507, %v505, %v487
        %v511 = vsel %vm507, %v506, %v496
        %vm512 = vcmask 1043456
        %v513 = vsel %vm512, %v508, 0.0
        %v514 = vsel %vm512, %v509, 0.0
        %v515 = vsel %vm512, %v510, 0.0
        %v516 = vsel %vm512, %v511, 0.0
        %v517 = vld [vmem:[%s227] sm:$0xff]
        %v518 = vld [vmem:[%s227 + $0x8] sm:$0xff]
        %v519 = vld [vmem:[%s227 + $0x10] sm:$0xff]
        %v520 = vld [vmem:[%s227 + $0x18] sm:$0xff]
        %v521 = vadd.f32 %v517, %v513
        %v522 = vadd.f32 %v518, %v514
        %v523 = vadd.f32 %v519, %v515
        %v524 = vadd.f32 %v520, %v516
        %525 = vst [vmem:[%s227] sm:$0xff] %v521
        %526 = vst [vmem:[%s227 + $0x8] sm:$0xff] %v522
        %527 = vst [vmem:[%s227 + $0x10] sm:$0xff] %v523
        %528 = vst [vmem:[%s227 + $0x18] sm:$0xff] %v524
        %s529 = sand.u32 %s98, 1
        %s530 = scalar_lea.sflag [#allocation4], %s529
        %s531 = sand.u32 %s98, 1
        %s532 = smul.addr %s531, 32
        %s533 = scalar_lea.vmem [#allocation7], %s532
        // Predicated region
        $region41: #{tpu_custom_call.1} parent=27 // pred_check
          %p534 = pneg %p108
        $region42: #{tpu_custom_call.1} parent=27 // pred_check_branch
          %536 = sbr.rel (%p534) target = $region44
        $region43: #{tpu_custom_call.1} parent=27 // pred_region
          %s537 = smul.u32 4, %s26
          %539 = vsyncadd %s530, 0
          %s540 = smul.addr %s537, 8
          %s541 = scalar_lea.hbm %s2, %s540
          %s542 = sshll.u32 %s533, 4
          %s543 = int_to_ptr.vmem [resolvable:$true] %s542
          %s544 = sshll.u32 %s541, 4
          %s545 = int_to_ptr.hbm [resolvable:$true] %s544
          %550 = dma.vmem_to_hbm [thread:$0]  %s543, 512, %s545, %s530, 128, 128, 8
        $region44: #{tpu_custom_call.1} parent=27 // pred_fallthru
          _
      $region28: #{tpu_custom_call.1} parent=5 // pred_fallthru
        _
      %p551 = scmp.le.s32.totalorder 2, %s17
      // Predicated region
      $region45: #{tpu_custom_call.1} parent=5 // pred_check
        %p552 = pneg %p551
      $region46: #{tpu_custom_call.1} parent=5 // pred_check_branch
        %554 = sbr.rel (%p552) target = $region48
      $region47: #{tpu_custom_call.1} parent=5 // pred_region
        %s555 = ssub.s32 %s17, 2
        // Predicated region
        $region49: #{tpu_custom_call.1} parent=47 // pred_check
          %p556 = pneg %p114
        $region50: #{tpu_custom_call.1} parent=47 // pred_check_branch
          %558 = sbr.rel (%p556) target = $region52
        $region51: #{tpu_custom_call.1} parent=47 // pred_region
          %s559 = sand.u32 %s99, 1
          %s560 = scalar_lea.sflag [#allocation4], %s559
          %s561 = sand.u32 %s99, 1
          %s562 = smul.addr %s561, 32
          %s563 = scalar_lea.vmem [#allocation7], %s562
          %565 = dma.done %s560, 512
        $region52: #{tpu_custom_call.1} parent=47 // pred_fallthru
          _
      $region48: #{tpu_custom_call.1} parent=5 // pred_fallthru
        _
    $region6: #{tpu_custom_call.1} parent=1 // loop_footer
      %s21 = sadd.s32 1, %s17
    $region7: #{tpu_custom_call.1} parent=1 // loop_footer_branch
      %16 = sbr.rel target = $region3
    $region8: #{tpu_custom_call.1} parent=1 // loop_exit
      _
    %566 = vsyncpa [#allocation3], 1
    %s567 = scalar_lea.sflag [#allocation3], 1
    %568 = vsyncpa %s567, 1
    %569 = vsyncpa [#allocation6], 1
    %s570 = scalar_lea.sflag [#allocation6], 1
    %571 = vsyncpa %s570, 1
    %572 = vsyncpa [#allocation4], 1
    %s573 = scalar_lea.sflag [#allocation4], 1
    %574 = vsyncpa %s573, 1

</llo_original>
